<compile_context>
chip_gen: v6e
topology: v6e:2x2x1
jax: 0.10.0
libtpu: 0.0.40
codegen_flags: <defaults>
</compile_context>

<pallas_src>
import jax
import jax.numpy as jnp
from jax.experimental import pallas as pl
from jax.experimental.pallas import tpu as pltpu


def _round_up(x, m):
    return (x + m - 1) // m * m


def _cdiv(a, b):
    return (a + b - 1) // b


def _vmem_capacity_bytes():
    """Physical VMEM per core; conservative 64 MiB fallback (v7x-safe)."""
    try:
        info = pltpu.get_tpu_info()
        for name in ("vmem_capacity_bytes", "vmem_bytes", "vmem_capacity"):
            v = getattr(info, name, None)
            if isinstance(v, int) and v > 0:
                return v
    except Exception:
        pass
    return 64 * 2**20


# ------------------------------------------------------------------ kernels -

def _mlp_kernel_fused(x_ref, w1_ref, b1_ref, w2_ref, b2_ref, o_ref):
    # Full fc1 contraction in one MXU call; no accumulator scratch round-trip.
    h = jnp.dot(x_ref[...], w1_ref[...], preferred_element_type=jnp.float32)
    h = jnp.maximum(h + b1_ref[...], 0.0)
    # TODO(synk): nn.Dropout(p=0.3) is identity in eval mode; training-mode
    # dropout would use pltpu.prng_seed/prng_random_bits + 1/(1-p) scaling.
    h = h.astype(w2_ref.dtype)          # intentional cast: fc2 MXU input dtype
    y = jnp.dot(h, w2_ref[...], preferred_element_type=jnp.float32)
    o_ref[...] = (y + b2_ref[...]).astype(o_ref.dtype)


def _mlp_kernel_ktiled(x_ref, w1_ref, b1_ref, w2_ref, b2_ref, o_ref, acc_ref):
    k = pl.program_id(1)

    @pl.when(k == 0)
    def _init():
        acc_ref[...] = jnp.zeros_like(acc_ref)

    # fc1 partial product for this K slab (MXU, f32 accumulation).
    acc_ref[...] += jnp.dot(x_ref[...], w1_ref[...],
                            preferred_element_type=jnp.float32)

    @pl.when(k == pl.num_programs(1) - 1)
    def _finalize():
        h = jnp.maximum(acc_ref[...] + b1_ref[...], 0.0)
        # TODO(synk): dropout is identity in eval mode (see fused kernel).
        h = h.astype(w2_ref.dtype)
        y = jnp.dot(h, w2_ref[...], preferred_element_type=jnp.float32)
        o_ref[...] = (y + b2_ref[...]).astype(o_ref.dtype)


# ------------------------------------------------------------------ wrapper -

def patient_classifier_forward(cls_emb, w1, b1, w2, b2, *, _force_k_tiles=None):
    """Forward pass of PatientClassifier.

    cls_emb : (B, H)      activations (f32 or bf16)
    w1      : (H, H//2)   fc1 weight, already transposed to (in, out)
    b1      : (H//2,)     fc1 bias (kept f32)
    w2      : (H//2, C)   fc2 weight, (in, out)
    b2      : (C,)        fc2 bias (kept f32)
    """
    B, H = cls_emb.shape
    Hh = w1.shape[1]
    C = w2.shape[1]
    out_dtype = cls_emb.dtype

    # dtype discipline: fc1 streams & computes in the weight dtype so bf16
    # weights actually hit the bf16 MXU.  Biases stay f32.
    x = cls_emb.astype(w1.dtype)
    b1 = jnp.asarray(b1, jnp.float32).reshape(1, -1)
    b2 = jnp.asarray(b2, jnp.float32).reshape(1, -1)

    LANE = 128
    xs = jnp.dtype(x.dtype).itemsize
    ws = jnp.dtype(w1.dtype).itemsize
    osz = jnp.dtype(out_dtype).itemsize
    sub = 8 * max(1, 4 // xs)              # 8 (f32) / 16 (bf16) / 32 (int8)

    Hh_pad = _round_up(Hh, LANE)
    C_pad = _round_up(C, LANE)             # lane-dense output stores (no vst.msk)
    H_pad = _round_up(H, LANE)             # sizing only; x stays unpadded if single-K

    cap = _vmem_capacity_bytes()
    v7x_like = cap <= 96 * 2**20           # 64 MiB VMEM, 2 TensorCores / chip
    budget = int(cap * 0.7)

    def tile_m(tm_max):
        n_m = max(1, _cdiv(B, tm_max))
        if v7x_like and n_m < 2 and B >= 2 * sub:
            n_m = 2                        # keep both v7x TensorCores busy
        tm = _round_up(_cdiv(B, n_m), sub)
        if tm >= B:
            tm = B                         # full-dim block: no batch padding
        return tm

    # Constant-index blocks are single-buffered (pl.Buffered(1)); biases padded
    # to 8 sublanes each in VMEM layout.
    fixed = Hh_pad * C_pad * ws + 8 * (Hh_pad + C_pad) * 4
    w1_full = H_pad * Hh_pad * ws

    tm = tile_m(256)
    act_io = 2 * tm * H_pad * xs + 2 * tm * C_pad * osz
    single_k = ((w1_full + fixed + act_io) <= budget) and (_force_k_tiles is None)

    # Weight / bias padding is exact: padded K rows / Hh cols / C cols are zero,
    # relu(0 + 0) = 0, so padded hidden columns contribute nothing to fc2.
    w2_p = jnp.pad(w2, ((0, Hh_pad - Hh), (0, C_pad - C)))
    b1_p = jnp.pad(b1, ((0, 0), (0, Hh_pad - Hh)))
    b2_p = jnp.pad(b2, ((0, 0), (0, C_pad - C)))

    if single_k:
        grid_m = _cdiv(B, tm)
        kd = H                             # full contraction as one block (no x pad)
        w1_p = jnp.pad(w1, ((0, 0), (0, Hh_pad - Hh)))

        grid = (grid_m,)
        in_specs = [
            pl.BlockSpec((tm, kd), lambda i: (i, 0)),                       # x
            pl.BlockSpec((kd, Hh_pad), lambda i: (0, 0),                    # W1
                         pipeline_mode=pl.Buffered(buffer_count=1)),
            pl.BlockSpec((1, Hh_pad), lambda i: (0, 0),                     # b1
                         pipeline_mode=pl.Buffered(buffer_count=1)),
            pl.BlockSpec((Hh_pad, C_pad), lambda i: (0, 0),                 # W2
                         pipeline_mode=pl.Buffered(buffer_count=1)),
            pl.BlockSpec((1, C_pad), lambda i: (0, 0),                      # b2
                         pipeline_mode=pl.Buffered(buffer_count=1)),
        ]
        out_spec = pl.BlockSpec((tm, C_pad), lambda i: (i, 0))
        scratch = []
        kernel = _mlp_kernel_fused
        semantics = ("parallel",)
        vmem_need = (2 * tm * H_pad * xs + H_pad * Hh_pad * ws + fixed
                     + 2 * tm * C_pad * osz + tm * Hh_pad * 4)
        w1_reads = 1
        operands = (x, w1_p, b1_p, w2_p, b2_p)
    else:
        # K-tiled fc1 contraction with f32 accumulator scratch.
        if (not v7x_like) and B >= 512:
            tm = tile_m(512)               # better weight-stream intensity on 128 MiB chips
        acc_bytes = tm * Hh_pad * 4
        act_io = 2 * tm * H_pad * xs + 2 * tm * C_pad * osz
        slab_budget = max(budget - fixed - act_io - acc_bytes,
                          4 * LANE * Hh_pad * ws)
        if _force_k_tiles is not None:
            nk = max(1, int(_force_k_tiles))
        else:
            nk = max(1, _cdiv(2 * w1_full, slab_budget))
        tk = _round_up(_cdiv(H_pad, nk), LANE)
        kd = _round_up(H_pad, tk)
        nk = kd // tk
        grid_m = _cdiv(B, tm)

        x_p = jnp.pad(x, ((0, 0), (0, kd - H))) if kd != H else x
        w1_p = jnp.pad(w1, ((0, kd - H), (0, Hh_pad - Hh)))

        def _serp(i, k):
            # Serpentine k order: reverse on odd batch tiles so the W1 slab
            # resident at a tile boundary is reused by the next tile (no re-DMA).
            return jnp.where(i % 2 == 0, k, nk - 1 - k)

        grid = (grid_m, nk)
        in_specs = [
            pl.BlockSpec((tm, tk), lambda i, k: (i, _serp(i, k))),          # x
            pl.BlockSpec((tk, Hh_pad), lambda i, k: (_serp(i, k), 0)),      # W1 slab
            pl.BlockSpec((1, Hh_pad), lambda i, k: (0, 0),                  # b1
                         pipeline_mode=pl.Buffered(buffer_count=1)),
            pl.BlockSpec((Hh_pad, C_pad), lambda i, k: (0, 0),              # W2
                         pipeline_mode=pl.Buffered(buffer_count=1)),
            pl.BlockSpec((1, C_pad), lambda i, k: (0, 0),                   # b2
                         pipeline_mode=pl.Buffered(buffer_count=1)),
        ]
        out_spec = pl.BlockSpec((tm, C_pad), lambda i, k: (i, 0))
        scratch = [pltpu.VMEM((tm, Hh_pad), jnp.float32)]
        kernel = _mlp_kernel_ktiled
        semantics = ("parallel", "arbitrary")
        vmem_need = (2 * tm * tk * xs + 2 * tk * Hh_pad * ws + fixed
                     + 2 * tm * C_pad * osz + acc_bytes)
        w1_reads = grid_m                  # W1 is re-streamed once per batch tile
        operands = (x_p, w1_p, b1_p, w2_p, b2_p)

    # Generation-aware VMEM limit (lifted 64 MiB clamp on 128 MiB chips).
    vmem_limit = int(min(max(int(vmem_need * 1.4) + (4 << 20), 32 << 20),
                         int(cap * 0.9)))

    # Advisory cost estimate for XLA's scheduler (counts W1 re-reads if K-tiled).
    kd_sz = H_pad if single_k else kd
    flops = 2 * B * kd_sz * Hh_pad + 2 * B * Hh_pad * C_pad
    bytes_accessed = (B * kd_sz * xs
                      + w1_reads * kd_sz * Hh_pad * ws
                      + Hh_pad * C_pad * ws
                      + (Hh_pad + C_pad) * 4
                      + B * C_pad * osz)
    cost = pl.CostEstimate(flops=flops, transcendentals=0,
                           bytes_accessed=bytes_accessed)

    out_p = pl.pallas_call(
        kernel,
        out_shape=jax.ShapeDtypeStruct((B, C_pad), out_dtype),
        grid_spec=pltpu.PrefetchScalarGridSpec(
            num_scalar_prefetch=0,
            grid=grid,
            in_specs=in_specs,
            out_specs=out_spec,
            scratch_shapes=scratch,
        ),
        compiler_params=pltpu.CompilerParams(
            dimension_semantics=semantics,
            vmem_limit_bytes=vmem_limit,
        ),
        cost_estimate=cost,
    )(*operands)

    return out_p[:, :C]


def init_params(key, hidden_size, num_classes=3, dtype=jnp.float32):
    """Deterministic init mimicking PyTorch nn.Linear default (uniform +/-1/sqrt(fan_in))."""
    h2 = hidden_size // 2
    k1, k2, k3, k4 = jax.random.split(key, 4)
    bound1 = 1.0 / (hidden_size ** 0.5)
    bound2 = 1.0 / (h2 ** 0.5)
    # weights stored as (in, out), i.e. transpose of PyTorch's (out, in)
    w1 = jax.random.uniform(k1, (hidden_size, h2), dtype, -bound1, bound1)
    b1 = jax.random.uniform(k2, (h2,), dtype, -bound1, bound1)
    w2 = jax.random.uniform(k3, (h2, num_classes), dtype, -bound2, bound2)
    b2 = jax.random.uniform(k4, (num_classes,), dtype, -bound2, bound2)
    return w1, b1, w2, b2


if __name__ == "__main__":
    key = jax.random.PRNGKey(0)
    k_x, k_p, k_x2, k_p2 = jax.random.split(key, 4)

    batch = 2
    hidden_size = 32
    num_classes = 3

    cls_emb = jax.random.normal(k_x, (batch, hidden_size), jnp.float32)
    w1, b1, w2, b2 = init_params(k_p, hidden_size, num_classes)

    # --- f32 path: strict check against a plain-JAX reference --------------
    out = jax.block_until_ready(patient_classifier_forward(cls_emb, w1, b1, w2, b2))
    ref = jnp.maximum(cls_emb @ w1 + b1[None, :], 0.0) @ w2 + b2[None, :]
    assert out.shape == (batch, num_classes)
    assert jnp.allclose(out, ref, atol=1e-5, rtol=1e-5)

    # --- bf16 weight/activation path (wrapper enforces matching MXU dtype) -
    cls_bf = cls_emb.astype(jnp.bfloat16)
    w1_bf = w1.astype(jnp.bfloat16)
    w2_bf = w2.astype(jnp.bfloat16)
    out_bf = jax.block_until_ready(
        patient_classifier_forward(cls_bf, w1_bf, b1, w2_bf, b2))
    h_ref = jnp.maximum(
        cls_bf.astype(jnp.float32) @ w1_bf.astype(jnp.float32) + b1[None, :], 0.0
    ).astype(jnp.bfloat16).astype(jnp.float32)
    ref_bf = h_ref @ w2_bf.astype(jnp.float32) + b2[None, :]
    assert out_bf.shape == (batch, num_classes)
    assert jnp.allclose(out_bf.astype(jnp.float32), ref_bf, atol=5e-2, rtol=5e-2)

    # --- exercise the K-tiled (serpentine + accumulator) path explicitly ---
    batch2, hidden2 = 8, 256
    x2 = jax.random.normal(k_x2, (batch2, hidden2), jnp.float32)
    w1_2, b1_2, w2_2, b2_2 = init_params(k_p2, hidden2, num_classes)
    out_kt = jax.block_until_ready(
        patient_classifier_forward(x2, w1_2, b1_2, w2_2, b2_2, _force_k_tiles=2))
    ref_kt = jnp.maximum(x2 @ w1_2 + b1_2[None, :], 0.0) @ w2_2 + b2_2[None, :]
    assert out_kt.shape == (batch2, num_classes)
    assert jnp.allclose(out_kt, ref_kt, atol=1e-4, rtol=1e-4)

    print("KERNEL_OK")
</pallas_src>

<mosaic_0001>
module attributes {stable_mosaic.version = 11 : i64} {
  func.func @_mlp_kernel_fused(%arg0: i32, %arg1: memref<2x32xf32, #tpu.memory_space<vmem>>, %arg2: memref<32x128xf32, #tpu.memory_space<vmem>>, %arg3: memref<1x128xf32, #tpu.memory_space<vmem>>, %arg4: memref<128x128xf32, #tpu.memory_space<vmem>>, %arg5: memref<1x128xf32, #tpu.memory_space<vmem>>, %arg6: memref<2x128xf32, #tpu.memory_space<vmem>>) attributes {dimension_semantics = [#tpu.dimension_semantics<parallel>], iteration_bounds = array<i64: 1>, scalar_prefetch = 0 : i64, scratch_operands = 0 : i64, tpu.core_type = #tpu.core_type<tc>, window_params = [{transform_indices = @transform_0, window_bounds = array<i64: 2, 32>}, {pipeline_mode = #tpu.pipeline_mode<synchronous>, transform_indices = @transform_1, window_bounds = array<i64: 32, 128>}, {pipeline_mode = #tpu.pipeline_mode<synchronous>, transform_indices = @transform_2, window_bounds = array<i64: 1, 128>}, {pipeline_mode = #tpu.pipeline_mode<synchronous>, transform_indices = @transform_3, window_bounds = array<i64: 128, 128>}, {pipeline_mode = #tpu.pipeline_mode<synchronous>, transform_indices = @transform_4, window_bounds = array<i64: 1, 128>}, {transform_indices = @transform_5, window_bounds = array<i64: 2, 128>}]} {
    %c0 = arith.constant 0 : index
    %c0_0 = arith.constant 0 : index
    %0 = vector.load %arg1[%c0, %c0_0] : memref<2x32xf32, #tpu.memory_space<vmem>>, vector<2x32xf32>
    %c0_1 = arith.constant 0 : index
    %c0_2 = arith.constant 0 : index
    %1 = vector.load %arg2[%c0_1, %c0_2] : memref<32x128xf32, #tpu.memory_space<vmem>>, vector<32x128xf32>
    %cst = arith.constant dense<0.000000e+00> : vector<2x128xf32>
    %2 = tpu.matmul %0, %1, %cst {dimension_numbers = #tpu.dot_dimension_numbers<[1], [0], [0], [1], [0, 0, 1, 1], [], []>} : vector<2x32xf32>, vector<32x128xf32>, vector<2x128xf32> -> vector<2x128xf32>
    %c0_3 = arith.constant 0 : index
    %c0_4 = arith.constant 0 : index
    %3 = vector.load %arg3[%c0_3, %c0_4] : memref<1x128xf32, #tpu.memory_space<vmem>>, vector<1x128xf32>
    %4 = vector.broadcast %3 : vector<1x128xf32> to vector<2x128xf32>
    %5 = arith.addf %2, %4 : vector<2x128xf32>
    %cst_5 = arith.constant 0.000000e+00 : f32
    %6 = vector.broadcast %cst_5 : f32 to vector<2x128xf32>
    %7 = arith.maximumf %5, %6 : vector<2x128xf32>
    %c0_6 = arith.constant 0 : index
    %c0_7 = arith.constant 0 : index
    %8 = vector.load %arg4[%c0_6, %c0_7] : memref<128x128xf32, #tpu.memory_space<vmem>>, vector<128x128xf32>
    %cst_8 = arith.constant dense<0.000000e+00> : vector<2x128xf32>
    %9 = tpu.matmul %7, %8, %cst_8 {dimension_numbers = #tpu.dot_dimension_numbers<[1], [0], [0], [1], [0, 0, 1, 1], [], []>} : vector<2x128xf32>, vector<128x128xf32>, vector<2x128xf32> -> vector<2x128xf32>
    %c0_9 = arith.constant 0 : index
    %c0_10 = arith.constant 0 : index
    %10 = vector.load %arg5[%c0_9, %c0_10] : memref<1x128xf32, #tpu.memory_space<vmem>>, vector<1x128xf32>
    %11 = vector.broadcast %10 : vector<1x128xf32> to vector<2x128xf32>
    %12 = arith.addf %9, %11 : vector<2x128xf32>
    %c0_11 = arith.constant 0 : index
    %c0_12 = arith.constant 0 : index
    %13 = vector.load %arg6[%c0_11, %c0_12] : memref<2x128xf32, #tpu.memory_space<vmem>>, vector<2x128xf32>
    tpu.vector_store %arg6[%c0_11, %c0_12], %12 {strides = array<i32>} : memref<2x128xf32, #tpu.memory_space<vmem>>, vector<2x128xf32>,
    return
  }
  func.func @transform_0(%arg0: i32) -> (i32, i32) {
    %c0_i32 = arith.constant 0 : i32
    %c0_i32_0 = arith.constant 0 : i32
    return %arg0, %c0_i32 : i32, i32
  }
  func.func @transform_1(%arg0: i32) -> (i32, i32) {
    %c0_i32 = arith.constant 0 : i32
    %c0_i32_0 = arith.constant 0 : i32
    %c0_i32_1 = arith.constant 0 : i32
    return %c0_i32, %c0_i32_0 : i32, i32
  }
  func.func @transform_2(%arg0: i32) -> (i32, i32) {
    %c0_i32 = arith.constant 0 : i32
    %c0_i32_0 = arith.constant 0 : i32
    %c0_i32_1 = arith.constant 0 : i32
    return %c0_i32, %c0_i32_0 : i32, i32
  }
  func.func @transform_3(%arg0: i32) -> (i32, i32) {
    %c0_i32 = arith.constant 0 : i32
    %c0_i32_0 = arith.constant 0 : i32
    %c0_i32_1 = arith.constant 0 : i32
    return %c0_i32, %c0_i32_0 : i32, i32
  }
  func.func @transform_4(%arg0: i32) -> (i32, i32) {
    %c0_i32 = arith.constant 0 : i32
    %c0_i32_0 = arith.constant 0 : i32
    %c0_i32_1 = arith.constant 0 : i32
    return %c0_i32, %c0_i32_0 : i32, i32
  }
  func.func @transform_5(%arg0: i32) -> (i32, i32) {
    %c0_i32 = arith.constant 0 : i32
    %c0_i32_0 = arith.constant 0 : i32
    return %arg0, %c0_i32 : i32, i32
  }
}

</mosaic_0001>

<llo_original>
// kernel: tpu_custom_call.1
$region0: #{tpu_custom_call.1}
  #allocation0 [shape = 'u32[]', space=smem, size = 0x4, offset = 0x4, fixed_abs, tag = 'smem constant byte address 0x4 - core index']
  #allocation1 [shape = 'u32[144,128]{1,0:T(1,128)}', space=vmem, size = 0x12000, scoped, tag = 'internal scratch']
  %s0 = inlined_call_operand.hbm [shape: f32[2,32], index: 0, kind: input, shape index: {}]
  %s1 = inlined_call_operand.hbm [shape: f32[32,128], index: 1, kind: input, shape index: {}]
  %s2 = inlined_call_operand.vmem [shape: f32[1,128], index: 2, kind: input, shape index: {}]
  %s3 = inlined_call_operand.hbm [shape: f32[128,128], index: 3, kind: input, shape index: {}]
  %s4 = inlined_call_operand.vmem [shape: f32[1,128], index: 4, kind: input, shape index: {}]
  %s5 = inlined_call_operand.hbm [shape: f32[2,128], index: 5, kind: output, shape index: {}]
  %s6 = sld [smem:[#allocation0]]
  $region42: #{tpu_custom_call.1} parent=0
    _
  %s8 = ssub.s32 1, %s6
  %s9 = scalar_select 0, %s8, %s6
  $region1: #{tpu_custom_call.1} parent=0
    #allocation2 [shape = 'u8[1024]{0}', space=vmem, size = 0x400, scoped, tag = 'input window, operand 0, single buffered']
    #allocation3 [shape = 's32[1]{0}', space=sflag, size = 0x4, scoped, tag = 'scoped memory for tpu_custom_call.1']
    #allocation4 [shape = 's32[1]{0}', space=sflag, size = 0x4, scoped, tag = 'scoped memory for tpu_custom_call.1']
    #allocation5 [shape = 'u8[16384]{0}', space=vmem, size = 0x4000, scoped, tag = 'input window, operand 1, single buffered']
    #allocation6 [shape = 's32[1]{0}', space=sflag, size = 0x4, scoped, tag = 'scoped memory for tpu_custom_call.1']
    #allocation7 [shape = 'u8[65536]{0}', space=vmem, size = 0x10000, scoped, tag = 'input window, operand 3, single buffered']
    #allocation8 [shape = 'u8[1024]{0}', space=vmem, size = 0x400, scoped, tag = 'output window, operand 0, single buffered']
    %10 = vsyncpa [#allocation3], 0
    %11 = vsyncpa [#allocation6], 0
    %12 = vsyncpa [#allocation4], 0
    // Predicated region
    $region2: #{tpu_custom_call.1} parent=1 // pred_check
      _
    $region3: #{tpu_custom_call.1} parent=1 // pred_check_branch
      %14 = sbr.rel (0) target = $region5
    $region4: #{tpu_custom_call.1} parent=1 // pred_region
      %s16 = ssub.s32 32, 32
      %17 = vsyncadd [#allocation3], %s16
      %s19 = sshll.u32 [#allocation2], 4
      %s20 = int_to_ptr.vmem [resolvable:$true] %s19
      %22 = dma.hbm_to_vmem [thread:$0]  %s0, 32, %s20, [#allocation3]
    $region5: #{tpu_custom_call.1} parent=1 // pred_fallthru
      _
    // Predicated region
    $region6: #{tpu_custom_call.1} parent=1 // pred_check
      _
    $region7: #{tpu_custom_call.1} parent=1 // pred_check_branch
      %24 = sbr.rel (0) target = $region9
    $region8: #{tpu_custom_call.1} parent=1 // pred_region
      %s26 = ssub.s32 512, 512
      %27 = vsyncadd [#allocation6], %s26
      %s28 = sshll.u32 [#allocation5], 4
      %s29 = int_to_ptr.vmem [resolvable:$true] %s28
      %34 = dma.hbm_to_vmem [thread:$0]  %s1, 512, %s29, [#allocation6], 128, 128, 8
    $region9: #{tpu_custom_call.1} parent=1 // pred_fallthru
      _
    // Predicated region
    $region10: #{tpu_custom_call.1} parent=1 // pred_check
      _
    $region11: #{tpu_custom_call.1} parent=1 // pred_check_branch
      %36 = sbr.rel (0) target = $region13
    $region12: #{tpu_custom_call.1} parent=1 // pred_region
      _
    $region13: #{tpu_custom_call.1} parent=1 // pred_fallthru
      _
    // Predicated region
    $region14: #{tpu_custom_call.1} parent=1 // pred_check
      _
    $region15: #{tpu_custom_call.1} parent=1 // pred_check_branch
      %38 = sbr.rel (0) target = $region17
    $region16: #{tpu_custom_call.1} parent=1 // pred_region
      %s40 = ssub.s32 2048, 2048
      %41 = vsyncadd [#allocation6], %s40
      %s42 = sshll.u32 [#allocation7], 4
      %s43 = int_to_ptr.vmem [resolvable:$true] %s42
      %48 = dma.hbm_to_vmem [thread:$0]  %s3, 2048, %s43, [#allocation6], 128, 128, 8
    $region17: #{tpu_custom_call.1} parent=1 // pred_fallthru
      _
    // Predicated region
    $region18: #{tpu_custom_call.1} parent=1 // pred_check
      _
    $region19: #{tpu_custom_call.1} parent=1 // pred_check_branch
      %50 = sbr.rel (0) target = $region21
    $region20: #{tpu_custom_call.1} parent=1 // pred_region
      _
    $region21: #{tpu_custom_call.1} parent=1 // pred_fallthru
      _
    // Predicated region
    $region22: #{tpu_custom_call.1} parent=1 // pred_check
      _
    $region23: #{tpu_custom_call.1} parent=1 // pred_check_branch
      %52 = sbr.rel (0) target = $region25
    $region24: #{tpu_custom_call.1} parent=1 // pred_region
      %53 = dma.done [#allocation3], 32
    $region25: #{tpu_custom_call.1} parent=1 // pred_fallthru
      _
    // Predicated region
    $region26: #{tpu_custom_call.1} parent=1 // pred_check
      _
    $region27: #{tpu_custom_call.1} parent=1 // pred_check_branch
      %55 = sbr.rel (0) target = $region29
    $region28: #{tpu_custom_call.1} parent=1 // pred_region
      %56 = dma.done [#allocation6], 512
    $region29: #{tpu_custom_call.1} parent=1 // pred_fallthru
      _
    // Predicated region
    $region30: #{tpu_custom_call.1} parent=1 // pred_check
      _
    $region31: #{tpu_custom_call.1} parent=1 // pred_check_branch
      %58 = sbr.rel (0) target = $region33
    $region32: #{tpu_custom_call.1} parent=1 // pred_region
      %59 = dma.done [#allocation6], 2048
    $region33: #{tpu_custom_call.1} parent=1 // pred_fallthru
      _
    %v60 = vld [vmem:[#allocation2] sm:$0x3]
    %v61 = vld [vmem:[#allocation5] sm:$0xff]
    %v62 = vld [vmem:[#allocation5 + $0x8] sm:$0xff]
    %v63 = vld [vmem:[#allocation5 + $0x10] sm:$0xff]
    %v64 = vld [vmem:[#allocation5 + $0x18] sm:$0xff]
    %v65 = vld [vmem:[%s2] sm:$0x1]
    %v67 = vlaneseq
    %v68 = vshrl.u32 %v67, 7
    %v69 = vsub.s32 0, %v68
    %v70 = vrot.slane %v65, %v69
    %vm72 = vcmask 261120
    %v74 = vsel %vm72, %v60, 0
    %76 = vmatprep.subr.mxu0 0.0
    %77 = vmatpush1.msra.mxu0 0.0
    %78 = vmatprep.subr.mxu0 0.0
    %79 = vmatpush1.msra.mxu0 0.0
    %80 = vmatprep.subr.mxu0 0.0
    %81 = vmatpush1.msra.mxu0 0.0
    %82 = vmatprep.subr.mxu0 0.0
    %83 = vmatpush1.msra.mxu0 0.0
    %84 = vmatprep.subr.mxu0 0.0
    %85 = vmatpush1.msra.mxu0 0.0
    %86 = vmatprep.subr.mxu0 0.0
    %87 = vmatpush1.msra.mxu0 0.0
    %88 = vmatprep.subr.mxu0 0.0
    %89 = vmatpush1.msra.mxu0 0.0
    %90 = vmatprep.subr.mxu0 0.0
    %91 = vmatpush1.msra.mxu0 0.0
    %92 = vmatprep.subr.mxu0 0.0
    %93 = vmatpush1.msra.mxu0 0.0
    %94 = vmatprep.subr.mxu0 0.0
    %95 = vmatpush1.msra.mxu0 0.0
    %96 = vmatprep.subr.mxu0 0.0
    %97 = vmatpush1.msra.mxu0 0.0
    %98 = vmatprep.subr.mxu0 0.0
    %99 = vmatpush1.msra.mxu0 0.0
    %100 = vmatprep.subr.mxu0 0.0
    %101 = vmatpush1.msra.mxu0 %v64
    %102 = vmatprep.subr.mxu0 0.0
    %103 = vmatpush1.msra.mxu0 %v63
    %104 = vmatprep.subr.mxu0 0.0
    %105 = vmatpush1.msra.mxu0 %v62
    %106 = vmatprep.subr.mxu0 0.0
    %107 = vmatpush1.msra.mxu0 %v61
    %108 = vmatprep.subr.mxu0 0.0
    %109 = vmatpush2.msra.mxu0 0.0
    %110 = vmatprep.subr.mxu0 0.0
    %111 = vmatpush2.msra.mxu0 0.0
    %112 = vmatprep.subr.mxu0 0.0
    %113 = vmatpush2.msra.mxu0 0.0
    %114 = vmatprep.subr.mxu0 0.0
    %115 = vmatpush2.msra.mxu0 0.0
    %116 = vmatprep.subr.mxu0 0.0
    %117 = vmatpush2.msra.mxu0 0.0
    %118 = vmatprep.subr.mxu0 0.0
    %119 = vmatpush2.msra.mxu0 0.0
    %120 = vmatprep.subr.mxu0 0.0
    %121 = vmatpush2.msra.mxu0 0.0
    %122 = vmatprep.subr.mxu0 0.0
    %123 = vmatpush2.msra.mxu0 0.0
    %124 = vmatprep.subr.mxu0 0.0
    %125 = vmatpush2.msra.mxu0 0.0
    %126 = vmatprep.subr.mxu0 0.0
    %127 = vmatpush2.msra.mxu0 0.0
    %128 = vmatprep.subr.mxu0 0.0
    %129 = vmatpush2.msra.mxu0 0.0
    %130 = vmatprep.subr.mxu0 0.0
    %131 = vmatpush2.msra.mxu0 0.0
    %132 = vmatprep.subr.mxu0 0.0
    %133 = vmatpush2.msra.mxu0 0.0
    %134 = vmatprep.subr.mxu0 0.0
    %135 = vmatpush2.msra.mxu0 0.0
    %136 = vmatprep.subr.mxu0 0.0
    %137 = vmatpush2.msra.mxu0 0.0
    %138 = vmatprep.subr.mxu0 0.0
    %139 = vmatpush2.msra.mxu0 0.0
    %140 = vmatprep.mubr.f32.mxu0 0.0
    %141 = vmatmul.mubr.f32.gmra.mxu0 %v74
    %v142 = vpop.f32.mrf.mxu0
    %v143 = vadd.f32 %v70, %v142
    %v144 = vpop.f32.mrf.mxu0
    %145 = vdwg.mxu0
    %v146 = vmax.f32 %v143, 0.0
    %v147 = vld [vmem:[#allocation7] sm:$0xff]
    %v148 = vld [vmem:[#allocation7 + $0x8] sm:$0xff]
    %v149 = vld [vmem:[#allocation7 + $0x10] sm:$0xff]
    %v150 = vld [vmem:[#allocation7 + $0x18] sm:$0xff]
    %v151 = vld [vmem:[#allocation7 + $0x20] sm:$0xff]
    %v152 = vld [vmem:[#allocation7 + $0x28] sm:$0xff]
    %v153 = vld [vmem:[#allocation7 + $0x30] sm:$0xff]
    %v154 = vld [vmem:[#allocation7 + $0x38] sm:$0xff]
    %v155 = vld [vmem:[#allocation7 + $0x40] sm:$0xff]
    %v156 = vld [vmem:[#allocation7 + $0x48] sm:$0xff]
    %v157 = vld [vmem:[#allocation7 + $0x50] sm:$0xff]
    %v158 = vld [vmem:[#allocation7 + $0x58] sm:$0xff]
    %v159 = vld [vmem:[#allocation7 + $0x60] sm:$0xff]
    %v160 = vld [vmem:[#allocation7 + $0x68] sm:$0xff]
    %v161 = vld [vmem:[#allocation7 + $0x70] sm:$0xff]
    %v162 = vld [vmem:[#allocation7 + $0x78] sm:$0xff]
    %v163 = vld [vmem:[%s4] sm:$0x1]
    %v165 = vlaneseq
    %v166 = vshrl.u32 %v165, 7
    %v167 = vsub.s32 0, %v166
    %v168 = vrot.slane %v163, %v167
    %170 = vmatprep.subr.mxu0 0.0
    %171 = vmatpush1.msra.mxu0 %v162
    %172 = vmatprep.subr.mxu0 0.0
    %173 = vmatpush1.msra.mxu0 %v161
    %174 = vmatprep.subr.mxu0 0.0
    %175 = vmatpush1.msra.mxu0 %v160
    %176 = vmatprep.subr.mxu0 0.0
    %177 = vmatpush1.msra.mxu0 %v159
    %178 = vmatprep.subr.mxu0 0.0
    %179 = vmatpush1.msra.mxu0 %v158
    %180 = vmatprep.subr.mxu0 0.0
    %181 = vmatpush1.msra.mxu0 %v157
    %182 = vmatprep.subr.mxu0 0.0
    %183 = vmatpush1.msra.mxu0 %v156
    %184 = vmatprep.subr.mxu0 0.0
    %185 = vmatpush1.msra.mxu0 %v155
    %186 = vmatprep.subr.mxu0 0.0
    %187 = vmatpush1.msra.mxu0 %v154
    %188 = vmatprep.subr.mxu0 0.0
    %189 = vmatpush1.msra.mxu0 %v153
    %190 = vmatprep.subr.mxu0 0.0
    %191 = vmatpush1.msra.mxu0 %v152
    %192 = vmatprep.subr.mxu0 0.0
    %193 = vmatpush1.msra.mxu0 %v151
    %194 = vmatprep.subr.mxu0 0.0
    %195 = vmatpush1.msra.mxu0 %v150
    %196 = vmatprep.subr.mxu0 0.0
    %197 = vmatpush1.msra.mxu0 %v149
    %198 = vmatprep.subr.mxu0 0.0
    %199 = vmatpush1.msra.mxu0 %v148
    %200 = vmatprep.subr.mxu0 0.0
    %201 = vmatpush1.msra.mxu0 %v147
    %202 = vmatprep.subr.mxu0 0.0
    %203 = vmatpush2.msra.mxu0 0.0
    %204 = vmatprep.subr.mxu0 0.0
    %205 = vmatpush2.msra.mxu0 0.0
    %206 = vmatprep.subr.mxu0 0.0
    %207 = vmatpush2.msra.mxu0 0.0
    %208 = vmatprep.subr.mxu0 0.0
    %209 = vmatpush2.msra.mxu0 0.0
    %210 = vmatprep.subr.mxu0 0.0
    %211 = vmatpush2.msra.mxu0 0.0
    %212 = vmatprep.subr.mxu0 0.0
    %213 = vmatpush2.msra.mxu0 0.0
    %214 = vmatprep.subr.mxu0 0.0
    %215 = vmatpush2.msra.mxu0 0.0
    %216 = vmatprep.subr.mxu0 0.0
    %217 = vmatpush2.msra.mxu0 0.0
    %218 = vmatprep.subr.mxu0 0.0
    %219 = vmatpush2.msra.mxu0 0.0
    %220 = vmatprep.subr.mxu0 0.0
    %221 = vmatpush2.msra.mxu0 0.0
    %222 = vmatprep.subr.mxu0 0.0
    %223 = vmatpush2.msra.mxu0 0.0
    %224 = vmatprep.subr.mxu0 0.0
    %225 = vmatpush2.msra.mxu0 0.0
    %226 = vmatprep.subr.mxu0 0.0
    %227 = vmatpush2.msra.mxu0 0.0
    %228 = vmatprep.subr.mxu0 0.0
    %229 = vmatpush2.msra.mxu0 0.0
    %230 = vmatprep.subr.mxu0 0.0
    %231 = vmatpush2.msra.mxu0 0.0
    %232 = vmatprep.subr.mxu0 0.0
    %233 = vmatpush2.msra.mxu0 0.0
    %234 = vmatprep.mubr.f32.mxu0 0.0
    %235 = vmatmul.mubr.f32.gmra.mxu0 %v146
    %v236 = vpop.f32.mrf.mxu0
    %v237 = vadd.f32 %v168, %v236
    %v238 = vpop.f32.mrf.mxu0
    %239 = vdwg.mxu0
    %240 = vst [vmem:[#allocation8] sm:$0x3] %v237
    // Predicated region
    $region34: #{tpu_custom_call.1} parent=1 // pred_check
      _
    $region35: #{tpu_custom_call.1} parent=1 // pred_check_branch
      %242 = sbr.rel (0) target = $region37
    $region36: #{tpu_custom_call.1} parent=1 // pred_region
      %s244 = ssub.s32 32, 32
      %245 = vsyncadd [#allocation4], %s244
      %s247 = sshll.u32 [#allocation8], 4
      %s248 = int_to_ptr.vmem [resolvable:$true] %s247
      %250 = dma.vmem_to_hbm [thread:$0]  %s248, 32, %s5, [#allocation4]
    $region37: #{tpu_custom_call.1} parent=1 // pred_fallthru
      _
    // Predicated region
    $region38: #{tpu_custom_call.1} parent=1 // pred_check
      _
    $region39: #{tpu_custom_call.1} parent=1 // pred_check_branch
      %252 = sbr.rel (0) target = $region41
    $region40: #{tpu_custom_call.1} parent=1 // pred_region
      %253 = dma.done [#allocation4], 32
    $region41: #{tpu_custom_call.1} parent=1 // pred_fallthru
      _
    %254 = vsyncpa [#allocation3], 1
    %255 = vsyncpa [#allocation6], 1
    %256 = vsyncpa [#allocation4], 1

</llo_original>
